<compile_context>
chip_gen: v7x
topology: tpu7x:2x2x1
jax: 0.10.0
libtpu: 0.0.40
codegen_flags: <defaults>
</compile_context>

<pallas_src>
import jax
import jax.numpy as jnp
from jax.experimental import pallas as pl
from jax.experimental.pallas import tpu as pltpu


def _se_kernel(x_ref, w1t_ref, w2t_ref, o_ref):
    # x_ref  : (Bt, C, HW) Bt batch elements (channels on sublanes, pixels on lanes)
    # w1t_ref: (C, NH)     fc[0].weight.T pre-scaled by 1/HW (mean folded in)
    # w2t_ref: (NH, C)     fc[2].weight.T
    # o_ref  : (Bt, C, HW)
    x = x_ref[...]
    xf = x.astype(jnp.float32)

    # Squeeze: sum over the lane (HW) axis; the 1/HW of the mean was folded
    # into w1t in the wrapper, so a plain sum suffices.
    gap = jnp.sum(xf, axis=-1)                                   # (Bt, C) f32

    # Excitation: both bias-free linears batched over the whole Bt tile
    # (one MXU round-trip per block, plain (m,k)x(k,n) dots, no transposes).
    h = jnp.dot(gap, w1t_ref[...], preferred_element_type=jnp.float32)  # (Bt, NH)
    h = jnp.maximum(h, 0.0)                                              # ReLU
    s = jnp.dot(h, w2t_ref[...], preferred_element_type=jnp.float32)    # (Bt, C)
    s = jax.nn.sigmoid(s)                                                # EUP

    # Scale: broadcast the per-(batch, channel) gate along the lane (HW) axis.
    o_ref[...] = (xf * s[:, :, None]).astype(o_ref.dtype)


def _pick_batch_tile(batch, per_batch_bytes, block_limit_bytes, min_steps):
    """Largest batch tile whose block fits the VMEM budget, preferring a grid
    with >= min_steps steps so the pipeline has something to overlap."""
    divisors = sorted((d for d in range(1, batch + 1) if batch % d == 0),
                      reverse=True)
    for steps_req in (min_steps, 2, 1):
        for bt in divisors:
            if bt * per_batch_bytes <= block_limit_bytes and batch // bt >= steps_req:
                return bt
    return 1


def se_connection(x_nchw, w1, w2, *, block_limit_bytes=4 << 20, min_grid_steps=4):
    """SEConnection forward.

    x_nchw: (B, C, H, W)
    w1:     (nhidden, C) = fc[0].weight  (Linear(nin=C, nhidden, bias=False))
    w2:     (C, nhidden) = fc[2].weight  (Linear(nhidden, nout=C, bias=False))
    returns (B, C, H, W), same dtype as x.
    """
    B, C, H, W = x_nchw.shape
    NH = w1.shape[0]
    assert w1.shape == (NH, C) and w2.shape == (C, NH)
    HW = H * W

    # Free reshape of NCHW (no transpose, no extra HBM pass).
    x = x_nchw.reshape(B, C, HW)

    # Pre-transpose the tiny weights (free XLA ops) and fold the 1/HW of the
    # global-average-pool into the first linear.
    w1t = (w1.astype(jnp.float32) * (1.0 / HW)).T    # (C, NH)
    w2t = w2.astype(jnp.float32).T                   # (NH, C)

    itemsize = jnp.dtype(x.dtype).itemsize
    per_batch_bytes = C * HW * itemsize
    bt = _pick_batch_tile(B, per_batch_bytes, block_limit_bytes, min_grid_steps)
    block_bytes = bt * per_batch_bytes

    # in + out tiles, double buffered, plus weights and headroom.  Stays well
    # under v7x's 64 MiB physical VMEM while lifting the 16/32 MiB scoped
    # defaults whenever larger blocks are requested.
    weight_bytes = 2 * NH * C * 4
    vmem_limit = int(min(max(4 * block_bytes + weight_bytes + (8 << 20), 16 << 20),
                         48 << 20))

    # TODO(synk): feature maps where even a (1, C, HW) tile exceeds the block
    #             budget need a two-pass (tiled-GAP then tiled-scale) variant.
    # TODO(synk): for HW not a multiple of 128 stores become masked (vst.msk);
    #             a lane-dense repack (pad HW / fold batch into lanes) would
    #             recover full store bandwidth for those shapes.

    out = pl.pallas_call(
        _se_kernel,
        out_shape=jax.ShapeDtypeStruct((B, C, HW), x.dtype),
        grid_spec=pltpu.PrefetchScalarGridSpec(
            num_scalar_prefetch=0,
            grid=(B // bt,),
            in_specs=[
                pl.BlockSpec((bt, C, HW), lambda i: (i, 0, 0)),
                pl.BlockSpec((C, NH), lambda i: (0, 0)),
                pl.BlockSpec((NH, C), lambda i: (0, 0)),
            ],
            out_specs=pl.BlockSpec((bt, C, HW), lambda i: (i, 0, 0)),
        ),
        compiler_params=pltpu.CompilerParams(
            dimension_semantics=("parallel",),
            vmem_limit_bytes=vmem_limit,
        ),
    )(x, w1t, w2t)
    return out.reshape(B, C, H, W)


def se_connection_ref(x, w1, w2):
    """Plain-JAX reference of the SEConnection forward."""
    xf = x.astype(jnp.float32)
    y = jnp.mean(xf, axis=(2, 3))                    # (B, C)
    h = jnp.maximum(y @ w1.T, 0.0)                   # (B, NH)
    s = jax.nn.sigmoid(h @ w2.T)                     # (B, C)
    return (xf * s[:, :, None, None]).astype(x.dtype)


if __name__ == "__main__":
    key = jax.random.PRNGKey(0)
    kx, k1, k2 = jax.random.split(key, 3)

    # Small but pipeline-exercising shapes: nin = nout = C (required by the
    # module), HW a multiple of 128 (lane-dense stores), B large enough that
    # the batch-tiled grid has several steps.
    B, C, H, W = 8, 128, 16, 16
    NH = 32

    x = jax.random.normal(kx, (B, C, H, W), dtype=jnp.float32)
    w1 = jax.random.normal(k1, (NH, C), dtype=jnp.float32) * (1.0 / jnp.sqrt(C))
    w2 = jax.random.normal(k2, (C, NH), dtype=jnp.float32) * (1.0 / jnp.sqrt(NH))

    out = jax.block_until_ready(se_connection(x, w1, w2))
    ref = jax.block_until_ready(se_connection_ref(x, w1, w2))

    assert out.shape == (B, C, H, W)
    assert jnp.allclose(out, ref, atol=1e-5, rtol=1e-5)
    print("KERNEL_OK")
</pallas_src>

<mosaic_0001>
module attributes {stable_mosaic.version = 11 : i64} {
  func.func @_se_kernel(%arg0: i32, %arg1: memref<2x128x256xf32, #tpu.memory_space<vmem>>, %arg2: memref<128x32xf32, #tpu.memory_space<vmem>>, %arg3: memref<32x128xf32, #tpu.memory_space<vmem>>, %arg4: memref<2x128x256xf32, #tpu.memory_space<vmem>>) attributes {dimension_semantics = [#tpu.dimension_semantics<parallel>], iteration_bounds = array<i64: 4>, scalar_prefetch = 0 : i64, scratch_operands = 0 : i64, tpu.core_type = #tpu.core_type<tc>, window_params = [{transform_indices = @transform_0, window_bounds = array<i64: 2, 128, 256>}, {pipeline_mode = #tpu.pipeline_mode<synchronous>, transform_indices = @transform_1, window_bounds = array<i64: 128, 32>}, {pipeline_mode = #tpu.pipeline_mode<synchronous>, transform_indices = @transform_2, window_bounds = array<i64: 32, 128>}, {transform_indices = @transform_3, window_bounds = array<i64: 2, 128, 256>}]} {
    %c0 = arith.constant 0 : index
    %c0_0 = arith.constant 0 : index
    %c0_1 = arith.constant 0 : index
    %0 = vector.load %arg1[%c0, %c0_0, %c0_1] : memref<2x128x256xf32, #tpu.memory_space<vmem>>, vector<2x128x256xf32>
    %cst = arith.constant dense<0.000000e+00> : vector<2x128xf32>
    %1 = vector.multi_reduction <add>, %0, %cst [2] : vector<2x128x256xf32> to vector<2x128xf32>
    %c0_2 = arith.constant 0 : index
    %c0_3 = arith.constant 0 : index
    %2 = vector.load %arg2[%c0_2, %c0_3] : memref<128x32xf32, #tpu.memory_space<vmem>>, vector<128x32xf32>
    %cst_4 = arith.constant dense<0.000000e+00> : vector<2x32xf32>
    %3 = tpu.matmul %1, %2, %cst_4 {dimension_numbers = #tpu.dot_dimension_numbers<[1], [0], [0], [1], [0, 0, 1, 1], [], []>} : vector<2x128xf32>, vector<128x32xf32>, vector<2x32xf32> -> vector<2x32xf32>
    %cst_5 = arith.constant 0.000000e+00 : f32
    %4 = vector.broadcast %cst_5 : f32 to vector<2x32xf32>
    %5 = arith.maximumf %3, %4 : vector<2x32xf32>
    %c0_6 = arith.constant 0 : index
    %c0_7 = arith.constant 0 : index
    %6 = vector.load %arg3[%c0_6, %c0_7] : memref<32x128xf32, #tpu.memory_space<vmem>>, vector<32x128xf32>
    %cst_8 = arith.constant dense<0.000000e+00> : vector<2x128xf32>
    %7 = tpu.matmul %5, %6, %cst_8 {dimension_numbers = #tpu.dot_dimension_numbers<[1], [0], [0], [1], [0, 0, 1, 1], [], []>} : vector<2x32xf32>, vector<32x128xf32>, vector<2x128xf32> -> vector<2x128xf32>
    %8 = arith.negf %7 : vector<2x128xf32>
    %9 = math.exp %8 : vector<2x128xf32>
    %cst_9 = arith.constant 1.000000e+00 : f32
    %10 = vector.broadcast %cst_9 : f32 to vector<2x128xf32>
    %11 = arith.addf %10, %9 : vector<2x128xf32>
    %12 = arith.divf %10, %11 : vector<2x128xf32>
    %13 = vector.shape_cast %12 : vector<2x128xf32> to vector<2x128x1xf32>
    %14 = vector.broadcast %13 : vector<2x128x1xf32> to vector<2x128x256xf32>
    %15 = arith.mulf %0, %14 : vector<2x128x256xf32>
    %c0_10 = arith.constant 0 : index
    %c0_11 = arith.constant 0 : index
    %c0_12 = arith.constant 0 : index
    %16 = vector.load %arg4[%c0_10, %c0_11, %c0_12] : memref<2x128x256xf32, #tpu.memory_space<vmem>>, vector<2x128x256xf32>
    tpu.vector_store %arg4[%c0_10, %c0_11, %c0_12], %15 {strides = array<i32>} : memref<2x128x256xf32, #tpu.memory_space<vmem>>, vector<2x128x256xf32>,
    return
  }
  func.func @transform_0(%arg0: i32) -> (i32, i32, i32) {
    %c0_i32 = arith.constant 0 : i32
    %c0_i32_0 = arith.constant 0 : i32
    %c0_i32_1 = arith.constant 0 : i32
    return %arg0, %c0_i32, %c0_i32_0 : i32, i32, i32
  }
  func.func @transform_1(%arg0: i32) -> (i32, i32) {
    %c0_i32 = arith.constant 0 : i32
    %c0_i32_0 = arith.constant 0 : i32
    %c0_i32_1 = arith.constant 0 : i32
    return %c0_i32, %c0_i32_0 : i32, i32
  }
  func.func @transform_2(%arg0: i32) -> (i32, i32) {
    %c0_i32 = arith.constant 0 : i32
    %c0_i32_0 = arith.constant 0 : i32
    %c0_i32_1 = arith.constant 0 : i32
    return %c0_i32, %c0_i32_0 : i32, i32
  }
  func.func @transform_3(%arg0: i32) -> (i32, i32, i32) {
    %c0_i32 = arith.constant 0 : i32
    %c0_i32_0 = arith.constant 0 : i32
    %c0_i32_1 = arith.constant 0 : i32
    return %arg0, %c0_i32, %c0_i32_0 : i32, i32, i32
  }
}

</mosaic_0001>

<llo_original>
// kernel: tpu_custom_call.1
$region0: #{tpu_custom_call.1}
  #allocation0 [shape = 'u32[]', space=smem, size = 0x4, offset = 0x4, fixed_abs, tag = 'smem constant byte address 0x4 - core index']
  #allocation1 [shape = 'u32[144,128]{1,0:T(1,128)}', space=vmem, size = 0x12000, scoped, tag = 'internal scratch']
  %s0 = inlined_call_operand.hbm [shape: f32[8,128,256], index: 0, kind: input, shape index: {}]
  %s1 = inlined_call_operand.vmem [shape: f32[128,32], index: 1, kind: input, shape index: {}]
  %s2 = inlined_call_operand.vmem [shape: f32[32,128], index: 2, kind: input, shape index: {}]
  %s3 = inlined_call_operand.hbm [shape: f32[8,128,256], index: 3, kind: output, shape index: {}]
  %s4 = sld [smem:[#allocation0]]
  $region49: #{tpu_custom_call.1} parent=0
    _
  %s6 = ssub.s32 1, %s4
  %s7 = scalar_select 0, %s6, %s4
  $region1: #{tpu_custom_call.1} parent=0
    #allocation2 [shape = 'u8[524288]{0}', space=vmem, size = 0x80000, scoped, tag = 'input window, operand 0']
    #allocation3 [shape = 's32[2]{0}', space=sflag, size = 0x8, scoped, tag = 'scoped memory for tpu_custom_call.1']
    #allocation4 [shape = 's32[2]{0}', space=sflag, size = 0x8, scoped, tag = 'scoped memory for tpu_custom_call.1']
    #allocation5 [shape = 'u8[524288]{0}', space=vmem, size = 0x80000, scoped, tag = 'output window, operand 0']
    %8 = vsyncpa [#allocation3], 0
    %s9 = scalar_lea.sflag [#allocation3], 1
    %10 = vsyncpa %s9, 0
    %11 = vsyncpa [#allocation4], 0
    %s12 = scalar_lea.sflag [#allocation4], 1
    %13 = vsyncpa %s12, 0
    loop: start=0, step=1, limit=6
    $region2: #{tpu_custom_call.1} parent=1 // loop_pre_header
      _
    $region3: #{tpu_custom_call.1} parent=1 // loop_header
      %s15 = sphi 0, %s19
      %p16 = scmp.ge.s32.totalorder %s15, 6
      %s25 = sphi 0, %s27
      %s28 = sphi 0, %s25
      %s29 = sphi 0, %s28
      %s45 = sphi 0, %s29
      %s49 = sphi 0, %s49
      %s51 = sphi 0, %s49
      %s52 = sphi 0, %s51
      %s66 = sphi 0, %s52
      %s70 = sphi 0, %s70
      %s72 = sphi 0, %s70
      %s73 = sphi 0, %s72
      %s87 = sphi 0, %s73
      %s93 = sphi 0, %s95
      %s96 = sphi 0, %s93
      %s97 = sphi 0, %s96
      %s113 = sphi 0, %s97
    $region4: #{tpu_custom_call.1} parent=1 // loop_header_branch
      %18 = sbr.rel (%p16) target = $region8
    $region5: #{tpu_custom_call.1} parent=1 // loop_body
      %s20 = ssub.s32 %s15, 1
      %s21 = ssub.s32 %s15, 2
      %s22 = sadd.s32 %s15, 1
      %s23 = ssub.s32 %s15, %s22
      %p24 = scmp.eq.s32.totalorder %s23, 0
      %s26 = sadd.s32 %s25, 1
      %s27 = scalar_select %p24, %s25, %s26
      %p30 = pneg %p24
      %p31 = scmp.eq.s32.totalorder %s15, 3
      %p32 = por %p30, %p31
      %p33 = scmp.ne.s32.totalorder %s25, %s28
      %p34 = scmp.eq.s32.totalorder %s15, 0
      %p35 = por %p33, %p34
      %p36 = scmp.ne.s32.totalorder %s25, %s28
      %p37 = scmp.eq.s32.totalorder %s20, 3
      %p38 = por %p36, %p37
      %p39 = scmp.ne.s32.totalorder %s28, %s29
      %p40 = scmp.eq.s32.totalorder %s20, 0
      %p41 = por %p39, %p40
      %p42 = scmp.ne.s32.totalorder %s28, %s29
      %p43 = scmp.eq.s32.totalorder %s21, 3
      %p44 = por %p42, %p43
      %p46 = scmp.ne.s32.totalorder %s29, %s45
      %p47 = scmp.eq.s32.totalorder %s21, 0
      %p48 = por %p46, %p47
      %s50 = sadd.s32 %s49, 1
      %p53 = scmp.eq.s32.totalorder %s15, 3
      %p54 = scmp.ne.s32.totalorder %s49, %s51
      %p55 = scmp.eq.s32.totalorder %s15, 0
      %p56 = por %p54, %p55
      %p57 = scmp.ne.s32.totalorder %s49, %s51
      %p58 = scmp.eq.s32.totalorder %s20, 3
      %p59 = por %p57, %p58
      %p60 = scmp.ne.s32.totalorder %s51, %s52
      %p61 = scmp.eq.s32.totalorder %s20, 0
      %p62 = por %p60, %p61
      %p63 = scmp.ne.s32.totalorder %s51, %s52
      %p64 = scmp.eq.s32.totalorder %s21, 3
      %p65 = por %p63, %p64
      %p67 = scmp.ne.s32.totalorder %s52, %s66
      %p68 = scmp.eq.s32.totalorder %s21, 0
      %p69 = por %p67, %p68
      %s71 = sadd.s32 %s70, 1
      %p74 = scmp.eq.s32.totalorder %s15, 3
      %p75 = scmp.ne.s32.totalorder %s70, %s72
      %p76 = scmp.eq.s32.totalorder %s15, 0
      %p77 = por %p75, %p76
      %p78 = scmp.ne.s32.totalorder %s70, %s72
      %p79 = scmp.eq.s32.totalorder %s20, 3
      %p80 = por %p78, %p79
      %p81 = scmp.ne.s32.totalorder %s72, %s73
      %p82 = scmp.eq.s32.totalorder %s20, 0
      %p83 = por %p81, %p82
      %p84 = scmp.ne.s32.totalorder %s72, %s73
      %p85 = scmp.eq.s32.totalorder %s21, 3
      %p86 = por %p84, %p85
      %p88 = scmp.ne.s32.totalorder %s73, %s87
      %p89 = scmp.eq.s32.totalorder %s21, 0
      %p90 = por %p88, %p89
      %s91 = ssub.s32 %s15, %s22
      %p92 = scmp.eq.s32.totalorder %s91, 0
      %s94 = sadd.s32 %s93, 1
      %s95 = scalar_select %p92, %s93, %s94
      %p98 = pneg %p92
      %p99 = scmp.eq.s32.totalorder %s15, 3
      %p100 = por %p98, %p99
      %p101 = scmp.ne.s32.totalorder %s93, %s96
      %p102 = scmp.eq.s32.totalorder %s15, 0
      %p103 = por %p101, %p102
      %p104 = scmp.ne.s32.totalorder %s93, %s96
      %p105 = scmp.eq.s32.totalorder %s20, 3
      %p106 = por %p104, %p105
      %p107 = scmp.ne.s32.totalorder %s96, %s97
      %p108 = scmp.eq.s32.totalorder %s20, 0
      %p109 = por %p107, %p108
      %p110 = scmp.ne.s32.totalorder %s96, %s97
      %p111 = scmp.eq.s32.totalorder %s21, 3
      %p112 = por %p110, %p111
      %p114 = scmp.ne.s32.totalorder %s97, %s113
      %p115 = scmp.eq.s32.totalorder %s21, 0
      %p116 = por %p114, %p115
      %p117 = scmp.le.s32.totalorder 1, %s15
      %p118 = scmp.lt.s32.totalorder %s15, 5
      %p119 = pnand %p117, %p118
      %p120 = pneg %p119
      // Predicated region
      $region9: #{tpu_custom_call.1} parent=5 // pred_check
        _
      $region10: #{tpu_custom_call.1} parent=5 // pred_check_branch
        %122 = sbr.rel (%p119) target = $region12
      $region11: #{tpu_custom_call.1} parent=5 // pred_region
        %s123 = ssub.s32 %s15, 1
        // Predicated region
        $region13: #{tpu_custom_call.1} parent=11 // pred_check
          %p124 = pneg %p62
        $region14: #{tpu_custom_call.1} parent=11 // pred_check_branch
          %126 = sbr.rel (%p124) target = $region16
        $region15: #{tpu_custom_call.1} parent=11 // pred_region
          _
        $region16: #{tpu_custom_call.1} parent=11 // pred_fallthru
          _
        // Predicated region
        $region17: #{tpu_custom_call.1} parent=11 // pred_check
          %p127 = pneg %p83
        $region18: #{tpu_custom_call.1} parent=11 // pred_check_branch
          %129 = sbr.rel (%p127) target = $region20
        $region19: #{tpu_custom_call.1} parent=11 // pred_region
          _
        $region20: #{tpu_custom_call.1} parent=11 // pred_fallthru
          _
      $region12: #{tpu_custom_call.1} parent=5 // pred_fallthru
        _
      %p130 = scmp.lt.s32.totalorder %s15, 4
      // Predicated region
      $region21: #{tpu_custom_call.1} parent=5 // pred_check
        %p131 = pneg %p130
      $region22: #{tpu_custom_call.1} parent=5 // pred_check_branch
        %133 = sbr.rel (%p131) target = $region24
      $region23: #{tpu_custom_call.1} parent=5 // pred_region
        // Predicated region
        $region25: #{tpu_custom_call.1} parent=23 // pred_check
          %p134 = pneg %p35
        $region26: #{tpu_custom_call.1} parent=23 // pred_check_branch
          %136 = sbr.rel (%p134) target = $region28
        $region27: #{tpu_custom_call.1} parent=23 // pred_region
          %s137 = sand.u32 %s25, 1
          %s138 = scalar_lea.sflag [#allocation3], %s137
          %s139 = sand.u32 %s25, 1
          %s140 = smul.addr %s139, 512
          %s141 = scalar_lea.vmem [#allocation2], %s140
          %s142 = smul.u32 2, %s15
          %s144 = ssub.s32 8192, 8192
          %145 = vsyncadd %s138, %s144
          %s146 = smul.addr %s142, 32
          %s147 = smul.addr %s146, 128
          %s148 = scalar_lea.hbm %s0, %s147
          %s149 = sshll.u32 %s141, 4
          %s150 = int_to_ptr.vmem [resolvable:$true] %s149
          %155 = dma.hbm_to_vmem [thread:$0]  %s148, 8192, %s150, %s138, 256, 256, 16
        $region28: #{tpu_custom_call.1} parent=23 // pred_fallthru
          _
      $region24: #{tpu_custom_call.1} parent=5 // pred_fallthru
        _
      %p156 = scmp.le.s32.totalorder 1, %s15
      %p157 = scmp.lt.s32.totalorder %s15, 5
      %p158 = pnand %p156, %p157
      %p159 = pneg %p158
      // Predicated region
      $region29: #{tpu_custom_call.1} parent=5 // pred_check
        _
      $region30: #{tpu_custom_call.1} parent=5 // pred_check_branch
        %161 = sbr.rel (%p158) target = $region32
      $region31: #{tpu_custom_call.1} parent=5 // pred_region
        %s162 = ssub.s32 %s15, 1
        %s163 = sand.u32 %s28, 1
        %s164 = scalar_lea.sflag [#allocation3], %s163
        %s165 = sand.u32 %s28, 1
        %s166 = smul.addr %s165, 512
        %s167 = scalar_lea.vmem [#allocation2], %s166
        // Predicated region
        $region33: #{tpu_custom_call.1} parent=31 // pred_check
          %p168 = pneg %p41
        $region34: #{tpu_custom_call.1} parent=31 // pred_check_branch
          %170 = sbr.rel (%p168) target = $region36
        $region35: #{tpu_custom_call.1} parent=31 // pred_region
          %171 = dma.done %s164, 8192
        $region36: #{tpu_custom_call.1} parent=31 // pred_fallthru
          _
        %s172 = sand.u32 %s28, 1
        %s173 = scalar_lea.sflag [#allocation3], %s172
        %s174 = sand.u32 %s28, 1
        %s175 = smul.addr %s174, 512
        %s176 = scalar_lea.vmem [#allocation2], %s175
        %p177 = pneg %p41
        %p178 = pneg %p38
        %p179 = pneg %p62
        %p180 = pneg %p59
        %p181 = pneg %p83
        %p182 = pneg %p80
        %p183 = pneg %p109
        %p184 = pneg %p106
        %s185 = sand.u32 %s96, 1
        %s186 = scalar_lea.sflag [#allocation4], %s185
        %s187 = sand.u32 %s96, 1
        %s188 = smul.addr %s187, 512
        %s189 = scalar_lea.vmem [#allocation5], %s188
        %s190 = smul.u32 2, %s20
        %s191 = smul.u32 2, %s20
        %v192 = vld [vmem:[%s167] sm:$0xff]
        %v193 = vld [vmem:[%s167 + $0x8] sm:$0xff]
        %v194 = vld [vmem:[%s167 + $0x10] sm:$0xff]
        %v195 = vld [vmem:[%s167 + $0x18] sm:$0xff]
        %v196 = vld [vmem:[%s167 + $0x20] sm:$0xff]
        %v197 = vld [vmem:[%s167 + $0x28] sm:$0xff]
        %v198 = vld [vmem:[%s167 + $0x30] sm:$0xff]
        %v199 = vld [vmem:[%s167 + $0x38] sm:$0xff]
        %v200 = vld [vmem:[%s167 + $0x40] sm:$0xff]
        %v201 = vld [vmem:[%s167 + $0x48] sm:$0xff]
        %v202 = vld [vmem:[%s167 + $0x50] sm:$0xff]
        %v203 = vld [vmem:[%s167 + $0x58] sm:$0xff]
        %v204 = vld [vmem:[%s167 + $0x60] sm:$0xff]
        %v205 = vld [vmem:[%s167 + $0x68] sm:$0xff]
        %v206 = vld [vmem:[%s167 + $0x70] sm:$0xff]
        %v207 = vld [vmem:[%s167 + $0x78] sm:$0xff]
        %v208 = vld [vmem:[%s167 + $0x80] sm:$0xff]
        %v209 = vld [vmem:[%s167 + $0x88] sm:$0xff]
        %v210 = vld [vmem:[%s167 + $0x90] sm:$0xff]
        %v211 = vld [vmem:[%s167 + $0x98] sm:$0xff]
        %v212 = vld [vmem:[%s167 + $0xa0] sm:$0xff]
        %v213 = vld [vmem:[%s167 + $0xa8] sm:$0xff]
        %v214 = vld [vmem:[%s167 + $0xb0] sm:$0xff]
        %v215 = vld [vmem:[%s167 + $0xb8] sm:$0xff]
        %v216 = vld [vmem:[%s167 + $0xc0] sm:$0xff]
        %v217 = vld [vmem:[%s167 + $0xc8] sm:$0xff]
        %v218 = vld [vmem:[%s167 + $0xd0] sm:$0xff]
        %v219 = vld [vmem:[%s167 + $0xd8] sm:$0xff]
        %v220 = vld [vmem:[%s167 + $0xe0] sm:$0xff]
        %v221 = vld [vmem:[%s167 + $0xe8] sm:$0xff]
        %v222 = vld [vmem:[%s167 + $0xf0] sm:$0xff]
        %v223 = vld [vmem:[%s167 + $0xf8] sm:$0xff]
        %v224 = vld [vmem:[%s167 + $0x100] sm:$0xff]
        %v225 = vld [vmem:[%s167 + $0x108] sm:$0xff]
        %v226 = vld [vmem:[%s167 + $0x110] sm:$0xff]
        %v227 = vld [vmem:[%s167 + $0x118] sm:$0xff]
        %v228 = vld [vmem:[%s167 + $0x120] sm:$0xff]
        %v229 = vld [vmem:[%s167 + $0x128] sm:$0xff]
        %v230 = vld [vmem:[%s167 + $0x130] sm:$0xff]
        %v231 = vld [vmem:[%s167 + $0x138] sm:$0xff]
        %v232 = vld [vmem:[%s167 + $0x140] sm:$0xff]
        %v233 = vld [vmem:[%s167 + $0x148] sm:$0xff]
        %v234 = vld [vmem:[%s167 + $0x150] sm:$0xff]
        %v235 = vld [vmem:[%s167 + $0x158] sm:$0xff]
        %v236 = vld [vmem:[%s167 + $0x160] sm:$0xff]
        %v237 = vld [vmem:[%s167 + $0x168] sm:$0xff]
        %v238 = vld [vmem:[%s167 + $0x170] sm:$0xff]
        %v239 = vld [vmem:[%s167 + $0x178] sm:$0xff]
        %v240 = vld [vmem:[%s167 + $0x180] sm:$0xff]
        %v241 = vld [vmem:[%s167 + $0x188] sm:$0xff]
        %v242 = vld [vmem:[%s167 + $0x190] sm:$0xff]
        %v243 = vld [vmem:[%s167 + $0x198] sm:$0xff]
        %v244 = vld [vmem:[%s167 + $0x1a0] sm:$0xff]
        %v245 = vld [vmem:[%s167 + $0x1a8] sm:$0xff]
        %v246 = vld [vmem:[%s167 + $0x1b0] sm:$0xff]
        %v247 = vld [vmem:[%s167 + $0x1b8] sm:$0xff]
        %v248 = vld [vmem:[%s167 + $0x1c0] sm:$0xff]
        %v249 = vld [vmem:[%s167 + $0x1c8] sm:$0xff]
        %v250 = vld [vmem:[%s167 + $0x1d0] sm:$0xff]
        %v251 = vld [vmem:[%s167 + $0x1d8] sm:$0xff]
        %v252 = vld [vmem:[%s167 + $0x1e0] sm:$0xff]
        %v253 = vld [vmem:[%s167 + $0x1e8] sm:$0xff]
        %v254 = vld [vmem:[%s167 + $0x1f0] sm:$0xff]
        %v255 = vld [vmem:[%s167 + $0x1f8] sm:$0xff]
        %v256 = vadd.f32 %v192, %v193
        %257 = vadd.xlane.f32.xlu0 %v256
        %v258 = vpop.xlane.xlu0 %257
        %v259 = vadd.f32 %v194, %v195
        %260 = vadd.xlane.f32.xlu0 %v259
        %v261 = vpop.xlane.xlu0 %260
        %v262 = vadd.f32 %v196, %v197
        %263 = vadd.xlane.f32.xlu0 %v262
        %v264 = vpop.xlane.xlu0 %263
        %v265 = vadd.f32 %v198, %v199
        %266 = vadd.xlane.f32.xlu0 %v265
        %v267 = vpop.xlane.xlu0 %266
        %v268 = vadd.f32 %v200, %v201
        %269 = vadd.xlane.f32.xlu0 %v268
        %v270 = vpop.xlane.xlu0 %269
        %v271 = vadd.f32 %v202, %v203
        %272 = vadd.xlane.f32.xlu0 %v271
        %v273 = vpop.xlane.xlu0 %272
        %v274 = vadd.f32 %v204, %v205
        %275 = vadd.xlane.f32.xlu0 %v274
        %v276 = vpop.xlane.xlu0 %275
        %v277 = vadd.f32 %v206, %v207
        %278 = vadd.xlane.f32.xlu0 %v277
        %v279 = vpop.xlane.xlu0 %278
        %v280 = vadd.f32 %v208, %v209
        %281 = vadd.xlane.f32.xlu0 %v280
        %v282 = vpop.xlane.xlu0 %281
        %v283 = vadd.f32 %v210, %v211
        %284 = vadd.xlane.f32.xlu0 %v283
        %v285 = vpop.xlane.xlu0 %284
        %v286 = vadd.f32 %v212, %v213
        %287 = vadd.xlane.f32.xlu0 %v286
        %v288 = vpop.xlane.xlu0 %287
        %v289 = vadd.f32 %v214, %v215
        %290 = vadd.xlane.f32.xlu0 %v289
        %v291 = vpop.xlane.xlu0 %290
        %v292 = vadd.f32 %v216, %v217
        %293 = vadd.xlane.f32.xlu0 %v292
        %v294 = vpop.xlane.xlu0 %293
        %v295 = vadd.f32 %v218, %v219
        %296 = vadd.xlane.f32.xlu0 %v295
        %v297 = vpop.xlane.xlu0 %296
        %v298 = vadd.f32 %v220, %v221
        %299 = vadd.xlane.f32.xlu0 %v298
        %v300 = vpop.xlane.xlu0 %299
        %v301 = vadd.f32 %v222, %v223
        %302 = vadd.xlane.f32.xlu0 %v301
        %v303 = vpop.xlane.xlu0 %302
        %v304 = vadd.f32 %v224, %v225
        %305 = vadd.xlane.f32.xlu0 %v304
        %v306 = vpop.xlane.xlu0 %305
        %v307 = vadd.f32 %v226, %v227
        %308 = vadd.xlane.f32.xlu0 %v307
        %v309 = vpop.xlane.xlu0 %308
        %v310 = vadd.f32 %v228, %v229
        %311 = vadd.xlane.f32.xlu0 %v310
        %v312 = vpop.xlane.xlu0 %311
        %v313 = vadd.f32 %v230, %v231
        %314 = vadd.xlane.f32.xlu0 %v313
        %v315 = vpop.xlane.xlu0 %314
        %v316 = vadd.f32 %v232, %v233
        %317 = vadd.xlane.f32.xlu0 %v316
        %v318 = vpop.xlane.xlu0 %317
        %v319 = vadd.f32 %v234, %v235
        %320 = vadd.xlane.f32.xlu0 %v319
        %v321 = vpop.xlane.xlu0 %320
        %v322 = vadd.f32 %v236, %v237
        %323 = vadd.xlane.f32.xlu0 %v322
        %v324 = vpop.xlane.xlu0 %323
        %v325 = vadd.f32 %v238, %v239
        %326 = vadd.xlane.f32.xlu0 %v325
        %v327 = vpop.xlane.xlu0 %326
        %v328 = vadd.f32 %v240, %v241
        %329 = vadd.xlane.f32.xlu0 %v328
        %v330 = vpop.xlane.xlu0 %329
        %v331 = vadd.f32 %v242, %v243
        %332 = vadd.xlane.f32.xlu0 %v331
        %v333 = vpop.xlane.xlu0 %332
        %v334 = vadd.f32 %v244, %v245
        %335 = vadd.xlane.f32.xlu0 %v334
        %v336 = vpop.xlane.xlu0 %335
        %v337 = vadd.f32 %v246, %v247
        %338 = vadd.xlane.f32.xlu0 %v337
        %v339 = vpop.xlane.xlu0 %338
        %v340 = vadd.f32 %v248, %v249
        %341 = vadd.xlane.f32.xlu0 %v340
        %v342 = vpop.xlane.xlu0 %341
        %v343 = vadd.f32 %v250, %v251
        %344 = vadd.xlane.f32.xlu0 %v343
        %v345 = vpop.xlane.xlu0 %344
        %v346 = vadd.f32 %v252, %v253
        %347 = vadd.xlane.f32.xlu0 %v346
        %v348 = vpop.xlane.xlu0 %347
        %v349 = vadd.f32 %v254, %v255
        %350 = vadd.xlane.f32.xlu0 %v349
        %v351 = vpop.xlane.xlu0 %350
        %v352 = vld [vmem:[%s1] sm:$0xff]
        %v353 = vld [vmem:[%s1 + $0x8] sm:$0xff]
        %v354 = vld [vmem:[%s1 + $0x10] sm:$0xff]
        %v355 = vld [vmem:[%s1 + $0x18] sm:$0xff]
        %v356 = vld [vmem:[%s1 + $0x20] sm:$0xff]
        %v357 = vld [vmem:[%s1 + $0x28] sm:$0xff]
        %v358 = vld [vmem:[%s1 + $0x30] sm:$0xff]
        %v359 = vld [vmem:[%s1 + $0x38] sm:$0xff]
        %v360 = vld [vmem:[%s1 + $0x40] sm:$0xff]
        %v361 = vld [vmem:[%s1 + $0x48] sm:$0xff]
        %v362 = vld [vmem:[%s1 + $0x50] sm:$0xff]
        %v363 = vld [vmem:[%s1 + $0x58] sm:$0xff]
        %v364 = vld [vmem:[%s1 + $0x60] sm:$0xff]
        %v365 = vld [vmem:[%s1 + $0x68] sm:$0xff]
        %v366 = vld [vmem:[%s1 + $0x70] sm:$0xff]
        %v367 = vld [vmem:[%s1 + $0x78] sm:$0xff]
        %v400 = vlaneseq
        %v401 = vand.u32 %v400, 127
        %v402 = vlaneseq
        %v403 = vshrl.u32 %v402, 7
        %v404 = vsub.s32 %v401, %v403
        %v405 = vrot.slane %v258, %v404
        %v406 = vadd.s32 %v401, 4294967288
        %v407 = vlaneseq
        %v408 = vshrl.u32 %v407, 7
        %v409 = vsub.s32 %v406, %v408
        %v410 = vrot.slane %v261, %v409
        %vm411 = vcmask 130112
        %v412 = vsel %vm411, %v410, %v405
        %v413 = vadd.s32 %v401, 4294967280
        %v414 = vlaneseq
        %v415 = vshrl.u32 %v414, 7
        %v416 = vsub.s32 %v413, %v415
        %v417 = vrot.slane %v264, %v416
        %vm418 = vcmask 195712
        %v419 = vsel %vm418, %v417, %v412
        %v420 = vadd.s32 %v401, 4294967272
        %v421 = vlaneseq
        %v422 = vshrl.u32 %v421, 7
        %v423 = vsub.s32 %v420, %v422
        %v424 = vrot.slane %v267, %v423
        %vm425 = vcmask 261312
        %v426 = vsel %vm425, %v424, %v419
        %v427 = vadd.s32 %v401, 4294967264
        %v428 = vlaneseq
        %v429 = vshrl.u32 %v428, 7
        %v430 = vsub.s32 %v427, %v429
        %v431 = vrot.slane %v270, %v430
        %vm432 = vcmask 326912
        %v433 = vsel %vm432, %v431, %v426
        %v434 = vadd.s32 %v401, 4294967256
        %v435 = vlaneseq
        %v436 = vshrl.u32 %v435, 7
        %v437 = vsub.s32 %v434, %v436
        %v438 = vrot.slane %v273, %v437
        %vm439 = vcmask 392512
        %v440 = vsel %vm439, %v438, %v433
        %v441 = vadd.s32 %v401, 4294967248
        %v442 = vlaneseq
        %v443 = vshrl.u32 %v442, 7
        %v444 = vsub.s32 %v441, %v443
        %v445 = vrot.slane %v276, %v444
        %vm446 = vcmask 458112
        %v447 = vsel %vm446, %v445, %v440
        %v448 = vadd.s32 %v401, 4294967240
        %v449 = vlaneseq
        %v450 = vshrl.u32 %v449, 7
        %v451 = vsub.s32 %v448, %v450
        %v452 = vrot.slane %v279, %v451
        %vm453 = vcmask 523712
        %v454 = vsel %vm453, %v452, %v447
        %v455 = vadd.s32 %v401, 4294967232
        %v456 = vlaneseq
        %v457 = vshrl.u32 %v456, 7
        %v458 = vsub.s32 %v455, %v457
        %v459 = vrot.slane %v282, %v458
        %vm460 = vcmask 589312
        %v461 = vsel %vm460, %v459, %v454
        %v462 = vadd.s32 %v401, 4294967224
        %v463 = vlaneseq
        %v464 = vshrl.u32 %v463, 7
        %v465 = vsub.s32 %v462, %v464
        %v466 = vrot.slane %v285, %v465
        %vm467 = vcmask 654912
        %v468 = vsel %vm467, %v466, %v461
        %v469 = vadd.s32 %v401, 4294967216
        %v470 = vlaneseq
        %v471 = vshrl.u32 %v470, 7
        %v472 = vsub.s32 %v469, %v471
        %v473 = vrot.slane %v288, %v472
        %vm474 = vcmask 720512
        %v475 = vsel %vm474, %v473, %v468
        %v476 = vadd.s32 %v401, 4294967208
        %v477 = vlaneseq
        %v478 = vshrl.u32 %v477, 7
        %v479 = vsub.s32 %v476, %v478
        %v480 = vrot.slane %v291, %v479
        %vm481 = vcmask 786112
        %v482 = vsel %vm481, %v480, %v475
        %v483 = vadd.s32 %v401, 4294967200
        %v484 = vlaneseq
        %v485 = vshrl.u32 %v484, 7
        %v486 = vsub.s32 %v483, %v485
        %v487 = vrot.slane %v294, %v486
        %vm488 = vcmask 851712
        %v489 = vsel %vm488, %v487, %v482
        %v490 = vadd.s32 %v401, 4294967192
        %v491 = vlaneseq
        %v492 = vshrl.u32 %v491, 7
        %v493 = vsub.s32 %v490, %v492
        %v494 = vrot.slane %v297, %v493
        %vm495 = vcmask 917312
        %v496 = vsel %vm495, %v494, %v489
        %v497 = vadd.s32 %v401, 4294967184
        %v498 = vlaneseq
        %v499 = vshrl.u32 %v498, 7
        %v500 = vsub.s32 %v497, %v499
        %v501 = vrot.slane %v300, %v500
        %vm502 = vcmask 982912
        %v503 = vsel %vm502, %v501, %v496
        %v504 = vadd.s32 %v401, 4294967176
        %v505 = vlaneseq
        %v506 = vshrl.u32 %v505, 7
        %v507 = vsub.s32 %v504, %v506
        %v508 = vrot.slane %v303, %v507
        %vm509 = vcmask 1048512
        %v510 = vsel %vm509, %v508, %v503
        %v511 = vlaneseq
        %v512 = vshrl.u32 %v511, 7
        %v513 = vsub.s32 %v401, %v512
        %v514 = vrot.slane %v306, %v513
        %v515 = vlaneseq
        %v516 = vshrl.u32 %v515, 7
        %v517 = vsub.s32 %v406, %v516
        %v518 = vrot.slane %v309, %v517
        %v519 = vsel %vm411, %v518, %v514
        %v520 = vlaneseq
        %v521 = vshrl.u32 %v520, 7
        %v522 = vsub.s32 %v413, %v521
        %v523 = vrot.slane %v312, %v522
        %v524 = vsel %vm418, %v523, %v519
        %v525 = vlaneseq
        %v526 = vshrl.u32 %v525, 7
        %v527 = vsub.s32 %v420, %v526
        %v528 = vrot.slane %v315, %v527
        %v529 = vsel %vm425, %v528, %v524
        %v530 = vlaneseq
        %v531 = vshrl.u32 %v530, 7
        %v532 = vsub.s32 %v427, %v531
        %v533 = vrot.slane %v318, %v532
        %v534 = vsel %vm432, %v533, %v529
        %v535 = vlaneseq
        %v536 = vshrl.u32 %v535, 7
        %v537 = vsub.s32 %v434, %v536
        %v538 = vrot.slane %v321, %v537
        %v539 = vsel %vm439, %v538, %v534
        %v540 = vlaneseq
        %v541 = vshrl.u32 %v540, 7
        %v542 = vsub.s32 %v441, %v541
        %v543 = vrot.slane %v324, %v542
        %v544 = vsel %vm446, %v543, %v539
        %v545 = vlaneseq
        %v546 = vshrl.u32 %v545, 7
        %v547 = vsub.s32 %v448, %v546
        %v548 = vrot.slane %v327, %v547
        %v549 = vsel %vm453, %v548, %v544
        %v550 = vlaneseq
        %v551 = vshrl.u32 %v550, 7
        %v552 = vsub.s32 %v455, %v551
        %v553 = vrot.slane %v330, %v552
        %v554 = vsel %vm460, %v553, %v549
        %v555 = vlaneseq
        %v556 = vshrl.u32 %v555, 7
        %v557 = vsub.s32 %v462, %v556
        %v558 = vrot.slane %v333, %v557
        %v559 = vsel %vm467, %v558, %v554
        %v560 = vlaneseq
        %v561 = vshrl.u32 %v560, 7
        %v562 = vsub.s32 %v469, %v561
        %v563 = vrot.slane %v336, %v562
        %v564 = vsel %vm474, %v563, %v559
        %v565 = vlaneseq
        %v566 = vshrl.u32 %v565, 7
        %v567 = vsub.s32 %v476, %v566
        %v568 = vrot.slane %v339, %v567
        %v569 = vsel %vm481, %v568, %v564
        %v570 = vlaneseq
        %v571 = vshrl.u32 %v570, 7
        %v572 = vsub.s32 %v483, %v571
        %v573 = vrot.slane %v342, %v572
        %v574 = vsel %vm488, %v573, %v569
        %v575 = vlaneseq
        %v576 = vshrl.u32 %v575, 7
        %v577 = vsub.s32 %v490, %v576
        %v578 = vrot.slane %v345, %v577
        %v579 = vsel %vm495, %v578, %v574
        %v580 = vlaneseq
        %v581 = vshrl.u32 %v580, 7
        %v582 = vsub.s32 %v497, %v581
        %v583 = vrot.slane %v348, %v582
        %v584 = vsel %vm502, %v583, %v579
        %v585 = vlaneseq
        %v586 = vshrl.u32 %v585, 7
        %v587 = vsub.s32 %v504, %v586
        %v588 = vrot.slane %v351, %v587
        %v589 = vsel %vm509, %v588, %v584
        %vm590 = vcmask 1041409
        %v591 = vsel %vm590, %v589, %v510
        %593 = vmatprep.subr.mxu0 0.0
        %594 = vmatpush1.msra.mxu0 %v352
        %595 = vmatprep.subr.mxu0 0.0
        %596 = vmatpush1.msra.mxu0 %v353
        %597 = vmatprep.subr.mxu0 0.0
        %598 = vmatpush1.msra.mxu0 %v354
        %599 = vmatprep.subr.mxu0 0.0
        %600 = vmatpush1.msra.mxu0 %v355
        %601 = vmatprep.subr.mxu0 0.0
        %602 = vmatpush1.msra.mxu0 %v356
        %603 = vmatprep.subr.mxu0 0.0
        %604 = vmatpush1.msra.mxu0 %v357
        %605 = vmatprep.subr.mxu0 0.0
        %606 = vmatpush1.msra.mxu0 %v358
        %607 = vmatprep.subr.mxu0 0.0
        %608 = vmatpush1.msra.mxu0 %v359
        %609 = vmatprep.subr.mxu0 0.0
        %610 = vmatpush1.msra.mxu0 %v360
        %611 = vmatprep.subr.mxu0 0.0
        %612 = vmatpush1.msra.mxu0 %v361
        %613 = vmatprep.subr.mxu0 0.0
        %614 = vmatpush1.msra.mxu0 %v362
        %615 = vmatprep.subr.mxu0 0.0
        %616 = vmatpush1.msra.mxu0 %v363
        %617 = vmatprep.subr.mxu0 0.0
        %618 = vmatpush1.msra.mxu0 %v364
        %619 = vmatprep.subr.mxu0 0.0
        %620 = vmatpush1.msra.mxu0 %v365
        %621 = vmatprep.subr.mxu0 0.0
        %622 = vmatpush1.msra.mxu0 %v366
        %623 = vmatprep.subr.mxu0 0.0
        %624 = vmatpush1.msra.mxu0 %v367
        %625 = vmatprep.subr.mxu0 0.0
        %626 = vmatpush1.msra.mxu0 0.0
        %627 = vmatprep.subr.mxu0 0.0
        %628 = vmatpush1.msra.mxu0 0.0
        %629 = vmatprep.subr.mxu0 0.0
        %630 = vmatpush1.msra.mxu0 0.0
        %631 = vmatprep.subr.mxu0 0.0
        %632 = vmatpush1.msra.mxu0 0.0
        %633 = vmatprep.subr.mxu0 0.0
        %634 = vmatpush1.msra.mxu0 0.0
        %635 = vmatprep.subr.mxu0 0.0
        %636 = vmatpush1.msra.mxu0 0.0
        %637 = vmatprep.subr.mxu0 0.0
        %638 = vmatpush1.msra.mxu0 0.0
        %639 = vmatprep.subr.mxu0 0.0
        %640 = vmatpush1.msra.mxu0 0.0
        %641 = vmatprep.subr.mxu0 0.0
        %642 = vmatpush1.msra.mxu0 0.0
        %643 = vmatprep.subr.mxu0 0.0
        %644 = vmatpush1.msra.mxu0 0.0
        %645 = vmatprep.subr.mxu0 0.0
        %646 = vmatpush1.msra.mxu0 0.0
        %647 = vmatprep.subr.mxu0 0.0
        %648 = vmatpush1.msra.mxu0 0.0
        %649 = vmatprep.subr.mxu0 0.0
        %650 = vmatpush1.msra.mxu0 0.0
        %651 = vmatprep.subr.mxu0 0.0
        %652 = vmatpush1.msra.mxu0 0.0
        %653 = vmatprep.subr.mxu0 0.0
        %654 = vmatpush1.msra.mxu0 0.0
        %655 = vmatprep.subr.mxu0 0.0
        %656 = vmatpush1.msra.mxu0 0.0
        %657 = vmatprep.mubr.f32.mxu0 0.0
        %658 = vmatmul.mubr.f32.gmra.mrb[0].mxu0 %v591
        %v659 = vpop.f32.mrb[0].mxu0
        %v660 = vadd.f32 0.0, %v659
        %v661 = vpop.f32.mrb[0].mxu0
        %662 = vdwg.mxu0
        %v663 = vmax.f32 %v660, 0.0
        %v664 = vld [vmem:[%s2] sm:$0xff]
        %v665 = vld [vmem:[%s2 + $0x8] sm:$0xff]
        %v666 = vld [vmem:[%s2 + $0x10] sm:$0xff]
        %v667 = vld [vmem:[%s2 + $0x18] sm:$0xff]
        %vm668 = vcmask 261120
        %v670 = vsel %vm668, %v663, 0
        %672 = vmatprep.subr.mxu0 0.0
        %673 = vmatpush1.msra.mxu0 %v664
        %674 = vmatprep.subr.mxu0 0.0
        %675 = vmatpush1.msra.mxu0 %v665
        %676 = vmatprep.subr.mxu0 0.0
        %677 = vmatpush1.msra.mxu0 %v666
        %678 = vmatprep.subr.mxu0 0.0
        %679 = vmatpush1.msra.mxu0 %v667
        %680 = vmatprep.subr.mxu0 0.0
        %681 = vmatpush1.msra.mxu0 0.0
        %682 = vmatprep.subr.mxu0 0.0
        %683 = vmatpush1.msra.mxu0 0.0
        %684 = vmatprep.subr.mxu0 0.0
        %685 = vmatpush1.msra.mxu0 0.0
        %686 = vmatprep.subr.mxu0 0.0
        %687 = vmatpush1.msra.mxu0 0.0
        %688 = vmatprep.subr.mxu0 0.0
        %689 = vmatpush1.msra.mxu0 0.0
        %690 = vmatprep.subr.mxu0 0.0
        %691 = vmatpush1.msra.mxu0 0.0
        %692 = vmatprep.subr.mxu0 0.0
        %693 = vmatpush1.msra.mxu0 0.0
        %694 = vmatprep.subr.mxu0 0.0
        %695 = vmatpush1.msra.mxu0 0.0
        %696 = vmatprep.subr.mxu0 0.0
        %697 = vmatpush1.msra.mxu0 0.0
        %698 = vmatprep.subr.mxu0 0.0
        %699 = vmatpush1.msra.mxu0 0.0
        %700 = vmatprep.subr.mxu0 0.0
        %701 = vmatpush1.msra.mxu0 0.0
        %702 = vmatprep.subr.mxu0 0.0
        %703 = vmatpush1.msra.mxu0 0.0
        %704 = vmatprep.subr.mxu0 0.0
        %705 = vmatpush1.msra.mxu0 0.0
        %706 = vmatprep.subr.mxu0 0.0
        %707 = vmatpush1.msra.mxu0 0.0
        %708 = vmatprep.subr.mxu0 0.0
        %709 = vmatpush1.msra.mxu0 0.0
        %710 = vmatprep.subr.mxu0 0.0
        %711 = vmatpush1.msra.mxu0 0.0
        %712 = vmatprep.subr.mxu0 0.0
        %713 = vmatpush1.msra.mxu0 0.0
        %714 = vmatprep.subr.mxu0 0.0
        %715 = vmatpush1.msra.mxu0 0.0
        %716 = vmatprep.subr.mxu0 0.0
        %717 = vmatpush1.msra.mxu0 0.0
        %718 = vmatprep.subr.mxu0 0.0
        %719 = vmatpush1.msra.mxu0 0.0
        %720 = vmatprep.subr.mxu0 0.0
        %721 = vmatpush1.msra.mxu0 0.0
        %722 = vmatprep.subr.mxu0 0.0
        %723 = vmatpush1.msra.mxu0 0.0
        %724 = vmatprep.subr.mxu0 0.0
        %725 = vmatpush1.msra.mxu0 0.0
        %726 = vmatprep.subr.mxu0 0.0
        %727 = vmatpush1.msra.mxu0 0.0
        %728 = vmatprep.subr.mxu0 0.0
        %729 = vmatpush1.msra.mxu0 0.0
        %730 = vmatprep.subr.mxu0 0.0
        %731 = vmatpush1.msra.mxu0 0.0
        %732 = vmatprep.subr.mxu0 0.0
        %733 = vmatpush1.msra.mxu0 0.0
        %734 = vmatprep.subr.mxu0 0.0
        %735 = vmatpush1.msra.mxu0 0.0
        %736 = vmatprep.mubr.f32.mxu0 0.0
        %737 = vmatmul.mubr.f32.gmra.mrb[0].mxu0 %v670
        %v738 = vpop.f32.mrb[0].mxu0
        %v739 = vadd.f32 0.0, %v738
        %v740 = vpop.f32.mrb[0].mxu0
        %741 = vdwg.mxu0
        %v742 = vxor.u32 %v739, 2147483648
        %v743 = vmul.f32 %v742, 1.442695
        %v744 = vpow.pop %v743
        %v745 = vadd.f32 %v744, 1.0
        %v746 = vrcp.pop %v745
        %v747 = vmul.f32 1.0, %v746
        %v748 = vlaneseq
        %v749 = vshrl.u32 %v748, 7
        %v750 = vsub.s32 0, %v749
        %v751 = vrot.slane %v747, %v750
        %753 = vbcast.lane.b32.xlu0 %v751, 256
        %v754 = vpop.permute.xlu0 %753
        %s756 = sor.u32 256, 8
        %757 = vbcast.lane.b32.xlu0 %v751, %s756
        %v758 = vpop.permute.xlu0 %757
        %s760 = sor.u32 256, 16
        %761 = vbcast.lane.b32.xlu0 %v751, %s760
        %v762 = vpop.permute.xlu0 %761
        %s764 = sor.u32 256, 24
        %765 = vbcast.lane.b32.xlu0 %v751, %s764
        %v766 = vpop.permute.xlu0 %765
        %s768 = sor.u32 256, 32
        %769 = vbcast.lane.b32.xlu0 %v751, %s768
        %v770 = vpop.permute.xlu0 %769
        %s772 = sor.u32 256, 40
        %773 = vbcast.lane.b32.xlu0 %v751, %s772
        %v774 = vpop.permute.xlu0 %773
        %s776 = sor.u32 256, 48
        %777 = vbcast.lane.b32.xlu0 %v751, %s776
        %v778 = vpop.permute.xlu0 %777
        %s780 = sor.u32 256, 56
        %781 = vbcast.lane.b32.xlu0 %v751, %s780
        %v782 = vpop.permute.xlu0 %781
        %s784 = sor.u32 256, 64
        %785 = vbcast.lane.b32.xlu0 %v751, %s784
        %v786 = vpop.permute.xlu0 %785
        %s788 = sor.u32 256, 72
        %789 = vbcast.lane.b32.xlu0 %v751, %s788
        %v790 = vpop.permute.xlu0 %789
        %s792 = sor.u32 256, 80
        %793 = vbcast.lane.b32.xlu0 %v751, %s792
        %v794 = vpop.permute.xlu0 %793
        %s796 = sor.u32 256, 88
        %797 = vbcast.lane.b32.xlu0 %v751, %s796
        %v798 = vpop.permute.xlu0 %797
        %s800 = sor.u32 256, 96
        %801 = vbcast.lane.b32.xlu0 %v751, %s800
        %v802 = vpop.permute.xlu0 %801
        %s804 = sor.u32 256, 104
        %805 = vbcast.lane.b32.xlu0 %v751, %s804
        %v806 = vpop.permute.xlu0 %805
        %s808 = sor.u32 256, 112
        %809 = vbcast.lane.b32.xlu0 %v751, %s808
        %v810 = vpop.permute.xlu0 %809
        %s812 = sor.u32 256, 120
        %813 = vbcast.lane.b32.xlu0 %v751, %s812
        %v814 = vpop.permute.xlu0 %813
        %v815 = vlaneseq
        %v816 = vshrl.u32 %v815, 7
        %v817 = vsub.s32 1, %v816
        %v818 = vrot.slane %v747, %v817
        %820 = vbcast.lane.b32.xlu0 %v818, 256
        %v821 = vpop.permute.xlu0 %820
        %s823 = sor.u32 256, 8
        %824 = vbcast.lane.b32.xlu0 %v818, %s823
        %v825 = vpop.permute.xlu0 %824
        %s827 = sor.u32 256, 16
        %828 = vbcast.lane.b32.xlu0 %v818, %s827
        %v829 = vpop.permute.xlu0 %828
        %s831 = sor.u32 256, 24
        %832 = vbcast.lane.b32.xlu0 %v818, %s831
        %v833 = vpop.permute.xlu0 %832
        %s835 = sor.u32 256, 32
        %836 = vbcast.lane.b32.xlu0 %v818, %s835
        %v837 = vpop.permute.xlu0 %836
        %s839 = sor.u32 256, 40
        %840 = vbcast.lane.b32.xlu0 %v818, %s839
        %v841 = vpop.permute.xlu0 %840
        %s843 = sor.u32 256, 48
        %844 = vbcast.lane.b32.xlu0 %v818, %s843
        %v845 = vpop.permute.xlu0 %844
        %s847 = sor.u32 256, 56
        %848 = vbcast.lane.b32.xlu0 %v818, %s847
        %v849 = vpop.permute.xlu0 %848
        %s851 = sor.u32 256, 64
        %852 = vbcast.lane.b32.xlu0 %v818, %s851
        %v853 = vpop.permute.xlu0 %852
        %s855 = sor.u32 256, 72
        %856 = vbcast.lane.b32.xlu0 %v818, %s855
        %v857 = vpop.permute.xlu0 %856
        %s859 = sor.u32 256, 80
        %860 = vbcast.lane.b32.xlu0 %v818, %s859
        %v861 = vpop.permute.xlu0 %860
        %s863 = sor.u32 256, 88
        %864 = vbcast.lane.b32.xlu0 %v818, %s863
        %v865 = vpop.permute.xlu0 %864
        %s867 = sor.u32 256, 96
        %868 = vbcast.lane.b32.xlu0 %v818, %s867
        %v869 = vpop.permute.xlu0 %868
        %s871 = sor.u32 256, 104
        %872 = vbcast.lane.b32.xlu0 %v818, %s871
        %v873 = vpop.permute.xlu0 %872
        %s875 = sor.u32 256, 112
        %876 = vbcast.lane.b32.xlu0 %v818, %s875
        %v877 = vpop.permute.xlu0 %876
        %s879 = sor.u32 256, 120
        %880 = vbcast.lane.b32.xlu0 %v818, %s879
        %v881 = vpop.permute.xlu0 %880
        %v882 = vmul.f32 %v192, %v754
        %v883 = vmul.f32 %v193, %v754
        %v884 = vmul.f32 %v194, %v758
        %v885 = vmul.f32 %v195, %v758
        %v886 = vmul.f32 %v196, %v762
        %v887 = vmul.f32 %v197, %v762
        %v888 = vmul.f32 %v198, %v766
        %v889 = vmul.f32 %v199, %v766
        %v890 = vmul.f32 %v200, %v770
        %v891 = vmul.f32 %v201, %v770
        %v892 = vmul.f32 %v202, %v774
        %v893 = vmul.f32 %v203, %v774
        %v894 = vmul.f32 %v204, %v778
        %v895 = vmul.f32 %v205, %v778
        %v896 = vmul.f32 %v206, %v782
        %v897 = vmul.f32 %v207, %v782
        %v898 = vmul.f32 %v208, %v786
        %v899 = vmul.f32 %v209, %v786
        %v900 = vmul.f32 %v210, %v790
        %v901 = vmul.f32 %v211, %v790
        %v902 = vmul.f32 %v212, %v794
        %v903 = vmul.f32 %v213, %v794
        %v904 = vmul.f32 %v214, %v798
        %v905 = vmul.f32 %v215, %v798
        %v906 = vmul.f32 %v216, %v802
        %v907 = vmul.f32 %v217, %v802
        %v908 = vmul.f32 %v218, %v806
        %v909 = vmul.f32 %v219, %v806
        %v910 = vmul.f32 %v220, %v810
        %v911 = vmul.f32 %v221, %v810
        %v912 = vmul.f32 %v222, %v814
        %v913 = vmul.f32 %v223, %v814
        %v914 = vmul.f32 %v224, %v821
        %v915 = vmul.f32 %v225, %v821
        %v916 = vmul.f32 %v226, %v825
        %v917 = vmul.f32 %v227, %v825
        %v918 = vmul.f32 %v228, %v829
        %v919 = vmul.f32 %v229, %v829
        %v920 = vmul.f32 %v230, %v833
        %v921 = vmul.f32 %v231, %v833
        %v922 = vmul.f32 %v232, %v837
        %v923 = vmul.f32 %v233, %v837
        %v924 = vmul.f32 %v234, %v841
        %v925 = vmul.f32 %v235, %v841
        %v926 = vmul.f32 %v236, %v845
        %v927 = vmul.f32 %v237, %v845
        %v928 = vmul.f32 %v238, %v849
        %v929 = vmul.f32 %v239, %v849
        %v930 = vmul.f32 %v240, %v853
        %v931 = vmul.f32 %v241, %v853
        %v932 = vmul.f32 %v242, %v857
        %v933 = vmul.f32 %v243, %v857
        %v934 = vmul.f32 %v244, %v861
        %v935 = vmul.f32 %v245, %v861
        %v936 = vmul.f32 %v246, %v865
        %v937 = vmul.f32 %v247, %v865
        %v938 = vmul.f32 %v248, %v869
        %v939 = vmul.f32 %v249, %v869
        %v940 = vmul.f32 %v250, %v873
        %v941 = vmul.f32 %v251, %v873
        %v942 = vmul.f32 %v252, %v877
        %v943 = vmul.f32 %v253, %v877
        %v944 = vmul.f32 %v254, %v881
        %v945 = vmul.f32 %v255, %v881
        %946 = vst [vmem:[%s189] sm:$0xff] %v882
        %947 = vst [vmem:[%s189 + $0x8] sm:$0xff] %v883
        %948 = vst [vmem:[%s189 + $0x10] sm:$0xff] %v884
        %949 = vst [vmem:[%s189 + $0x18] sm:$0xff] %v885
        %950 = vst [vmem:[%s189 + $0x20] sm:$0xff] %v886
        %951 = vst [vmem:[%s189 + $0x28] sm:$0xff] %v887
        %952 = vst [vmem:[%s189 + $0x30] sm:$0xff] %v888
        %953 = vst [vmem:[%s189 + $0x38] sm:$0xff] %v889
        %954 = vst [vmem:[%s189 + $0x40] sm:$0xff] %v890
        %955 = vst [vmem:[%s189 + $0x48] sm:$0xff] %v891
        %956 = vst [vmem:[%s189 + $0x50] sm:$0xff] %v892
        %957 = vst [vmem:[%s189 + $0x58] sm:$0xff] %v893
        %958 = vst [vmem:[%s189 + $0x60] sm:$0xff] %v894
        %959 = vst [vmem:[%s189 + $0x68] sm:$0xff] %v895
        %960 = vst [vmem:[%s189 + $0x70] sm:$0xff] %v896
        %961 = vst [vmem:[%s189 + $0x78] sm:$0xff] %v897
        %962 = vst [vmem:[%s189 + $0x80] sm:$0xff] %v898
        %963 = vst [vmem:[%s189 + $0x88] sm:$0xff] %v899
        %964 = vst [vmem:[%s189 + $0x90] sm:$0xff] %v900
        %965 = vst [vmem:[%s189 + $0x98] sm:$0xff] %v901
        %966 = vst [vmem:[%s189 + $0xa0] sm:$0xff] %v902
        %967 = vst [vmem:[%s189 + $0xa8] sm:$0xff] %v903
        %968 = vst [vmem:[%s189 + $0xb0] sm:$0xff] %v904
        %969 = vst [vmem:[%s189 + $0xb8] sm:$0xff] %v905
        %970 = vst [vmem:[%s189 + $0xc0] sm:$0xff] %v906
        %971 = vst [vmem:[%s189 + $0xc8] sm:$0xff] %v907
        %972 = vst [vmem:[%s189 + $0xd0] sm:$0xff] %v908
        %973 = vst [vmem:[%s189 + $0xd8] sm:$0xff] %v909
        %974 = vst [vmem:[%s189 + $0xe0] sm:$0xff] %v910
        %975 = vst [vmem:[%s189 + $0xe8] sm:$0xff] %v911
        %976 = vst [vmem:[%s189 + $0xf0] sm:$0xff] %v912
        %977 = vst [vmem:[%s189 + $0xf8] sm:$0xff] %v913
        %978 = vst [vmem:[%s189 + $0x100] sm:$0xff] %v914
        %979 = vst [vmem:[%s189 + $0x108] sm:$0xff] %v915
        %980 = vst [vmem:[%s189 + $0x110] sm:$0xff] %v916
        %981 = vst [vmem:[%s189 + $0x118] sm:$0xff] %v917
        %982 = vst [vmem:[%s189 + $0x120] sm:$0xff] %v918
        %983 = vst [vmem:[%s189 + $0x128] sm:$0xff] %v919
        %984 = vst [vmem:[%s189 + $0x130] sm:$0xff] %v920
        %985 = vst [vmem:[%s189 + $0x138] sm:$0xff] %v921
        %986 = vst [vmem:[%s189 + $0x140] sm:$0xff] %v922
        %987 = vst [vmem:[%s189 + $0x148] sm:$0xff] %v923
        %988 = vst [vmem:[%s189 + $0x150] sm:$0xff] %v924
        %989 = vst [vmem:[%s189 + $0x158] sm:$0xff] %v925
        %990 = vst [vmem:[%s189 + $0x160] sm:$0xff] %v926
        %991 = vst [vmem:[%s189 + $0x168] sm:$0xff] %v927
        %992 = vst [vmem:[%s189 + $0x170] sm:$0xff] %v928
        %993 = vst [vmem:[%s189 + $0x178] sm:$0xff] %v929
        %994 = vst [vmem:[%s189 + $0x180] sm:$0xff] %v930
        %995 = vst [vmem:[%s189 + $0x188] sm:$0xff] %v931
        %996 = vst [vmem:[%s189 + $0x190] sm:$0xff] %v932
        %997 = vst [vmem:[%s189 + $0x198] sm:$0xff] %v933
        %998 = vst [vmem:[%s189 + $0x1a0] sm:$0xff] %v934
        %999 = vst [vmem:[%s189 + $0x1a8] sm:$0xff] %v935
        %1000 = vst [vmem:[%s189 + $0x1b0] sm:$0xff] %v936
        %1001 = vst [vmem:[%s189 + $0x1b8] sm:$0xff] %v937
        %1002 = vst [vmem:[%s189 + $0x1c0] sm:$0xff] %v938
        %1003 = vst [vmem:[%s189 + $0x1c8] sm:$0xff] %v939
        %1004 = vst [vmem:[%s189 + $0x1d0] sm:$0xff] %v940
        %1005 = vst [vmem:[%s189 + $0x1d8] sm:$0xff] %v941
        %1006 = vst [vmem:[%s189 + $0x1e0] sm:$0xff] %v942
        %1007 = vst [vmem:[%s189 + $0x1e8] sm:$0xff] %v943
        %1008 = vst [vmem:[%s189 + $0x1f0] sm:$0xff] %v944
        %1009 = vst [vmem:[%s189 + $0x1f8] sm:$0xff] %v945
        %s1010 = sand.u32 %s96, 1
        %s1011 = scalar_lea.sflag [#allocation4], %s1010
        %s1012 = sand.u32 %s96, 1
        %s1013 = smul.addr %s1012, 512
        %s1014 = scalar_lea.vmem [#allocation5], %s1013
        // Predicated region
        $region37: #{tpu_custom_call.1} parent=31 // pred_check
          %p1015 = pneg %p106
        $region38: #{tpu_custom_call.1} parent=31 // pred_check_branch
          %1017 = sbr.rel (%p1015) target = $region40
        $region39: #{tpu_custom_call.1} parent=31 // pred_region
          %s1018 = smul.u32 2, %s20
          %s1020 = ssub.s32 8192, 8192
          %1021 = vsyncadd %s1011, %s1020
          %s1022 = smul.addr %s1018, 32
          %s1023 = smul.addr %s1022, 128
          %s1024 = scalar_lea.hbm %s3, %s1023
          %s1025 = sshll.u32 %s1014, 4
          %s1026 = int_to_ptr.vmem [resolvable:$true] %s1025
          %1031 = dma.vmem_to_hbm [thread:$0]  %s1026, 8192, %s1024, %s1011, 256, 256, 16
        $region40: #{tpu_custom_call.1} parent=31 // pred_fallthru
          _
      $region32: #{tpu_custom_call.1} parent=5 // pred_fallthru
        _
      %p1032 = scmp.le.s32.totalorder 2, %s15
      // Predicated region
      $region41: #{tpu_custom_call.1} parent=5 // pred_check
        %p1033 = pneg %p1032
      $region42: #{tpu_custom_call.1} parent=5 // pred_check_branch
        %1035 = sbr.rel (%p1033) target = $region44
      $region43: #{tpu_custom_call.1} parent=5 // pred_region
        %s1036 = ssub.s32 %s15, 2
        // Predicated region
        $region45: #{tpu_custom_call.1} parent=43 // pred_check
          %p1037 = pneg %p112
        $region46: #{tpu_custom_call.1} parent=43 // pred_check_branch
          %1039 = sbr.rel (%p1037) target = $region48
        $region47: #{tpu_custom_call.1} parent=43 // pred_region
          %s1040 = sand.u32 %s97, 1
          %s1041 = scalar_lea.sflag [#allocation4], %s1040
          %s1042 = sand.u32 %s97, 1
          %s1043 = smul.addr %s1042, 512
          %s1044 = scalar_lea.vmem [#allocation5], %s1043
          %1045 = dma.done %s1041, 8192
        $region48: #{tpu_custom_call.1} parent=43 // pred_fallthru
          _
      $region44: #{tpu_custom_call.1} parent=5 // pred_fallthru
        _
    $region6: #{tpu_custom_call.1} parent=1 // loop_footer
      %s19 = sadd.s32 1, %s15
    $region7: #{tpu_custom_call.1} parent=1 // loop_footer_branch
      %14 = sbr.rel target = $region3
    $region8: #{tpu_custom_call.1} parent=1 // loop_exit
      _
    %1046 = vsyncpa [#allocation3], 1
    %s1047 = scalar_lea.sflag [#allocation3], 1
    %1048 = vsyncpa %s1047, 1
    %1049 = vsyncpa [#allocation4], 1
    %s1050 = scalar_lea.sflag [#allocation4], 1
    %1051 = vsyncpa %s1050, 1

</llo_original>
